<compile_context>
chip_gen: v7x
topology: tpu7x:2x2x1
jax: 0.10.0
libtpu: 0.0.40
codegen_flags: <defaults>
</compile_context>

<pallas_src>
import math

import jax
import jax.numpy as jnp
from jax import lax
from jax.experimental import pallas as pl
from jax.experimental.pallas import tpu as pltpu

_VMEM_LIMIT = 32 * 1024 * 1024  # explicit scoped-VMEM budget; safe on v5e/v6e (128 MiB) and v7x (64 MiB)


# --------------------------------------------------------------------------------------
# Tiled matmul with fused epilogue (bias / BN affine / ReLU|ELU / residual + LayerNorm)
# --------------------------------------------------------------------------------------

def _pad_axis(arr, axis, mult):
    d = arr.shape[axis]
    pad = (-d) % mult
    if pad == 0:
        return arr
    widths = [(0, 0)] * arr.ndim
    widths[axis] = (0, pad)
    return jnp.pad(arr, widths)


def matmul_fused(a, w, *, bias=None, scale=None, shift=None, act=None,
                 residual=None, ln=None, out_dtype=jnp.bfloat16,
                 tm=256, tn=512, tk=1024):
    """act(((A@W + bias [+residual]) [LayerNorm]) * scale + shift). A:(M,K), W:(K,N).

    bf16 MXU operands, f32 accumulation + epilogue. Grid=(M/tm, N/tn, K/tk) with K innermost
    ('arbitrary'), f32 VMEM accumulator, epilogue applied on the last K step via pl.when."""
    M, K = a.shape
    K2, N = w.shape
    assert K == K2
    a = a.astype(jnp.bfloat16)
    w = w.astype(jnp.bfloat16)

    has_bias = bias is not None
    has_affine = scale is not None
    has_res = residual is not None
    has_ln = ln is not None

    tm_ = M if M <= tm else tm
    tk_ = K if K <= tk else tk
    tn_ = N if (has_ln or N <= tn) else tn    # LayerNorm epilogue needs the full row in one block

    a_p = _pad_axis(_pad_axis(a, 0, tm_), 1, tk_)
    w_p = _pad_axis(_pad_axis(w, 0, tk_), 1, tn_)
    Mp, Kp = a_p.shape
    Np = w_p.shape[1]
    gm, gn, gk = Mp // tm_, Np // tn_, Kp // tk_

    vec_spec = pl.BlockSpec((1, tn_), lambda i, j, k: (0, j))
    extra, extra_specs = [], []

    def add_vec(v):
        extra.append(_pad_axis(v.reshape(1, N).astype(jnp.float32), 1, tn_))
        extra_specs.append(vec_spec)

    if has_bias:
        add_vec(bias)
    if has_res:
        extra.append(_pad_axis(_pad_axis(residual.astype(jnp.bfloat16), 0, tm_), 1, tn_))
        extra_specs.append(pl.BlockSpec((tm_, tn_), lambda i, j, k: (i, j)))
    if has_ln:
        add_vec(ln[0])
        add_vec(ln[1])
    if has_affine:
        add_vec(scale)
        add_vec(shift)

    def kernel(a_ref, w_ref, *rest):
        o_ref, acc_ref = rest[-2], rest[-1]
        extras = rest[:-2]
        kk = pl.program_id(2)

        @pl.when(kk == 0)
        def _():
            acc_ref[...] = jnp.zeros_like(acc_ref)

        acc_ref[...] += jnp.dot(a_ref[...], w_ref[...],
                                preferred_element_type=jnp.float32)

        @pl.when(kk == pl.num_programs(2) - 1)
        def _():
            idx = 0
            y = acc_ref[...]
            if has_bias:
                y = y + extras[0][...]
                idx = 1
            if has_res:
                y = y + extras[idx][...].astype(jnp.float32)
                idx += 1
            if has_ln:
                g = extras[idx][...]
                b2 = extras[idx + 1][...]
                idx += 2
                mu = jnp.mean(y, axis=-1, keepdims=True)
                var = jnp.mean(jnp.square(y - mu), axis=-1, keepdims=True)
                y = (y - mu) * lax.rsqrt(var + 1e-5) * g + b2
            if has_affine:
                y = y * extras[idx][...] + extras[idx + 1][...]
            if act == "relu":
                y = jnp.maximum(y, 0.0)
            elif act == "elu":
                # exp(min(y,0))-1 instead of expm1 to stay on ops guaranteed by Mosaic lowering.
                y = jnp.where(y > 0, y, jnp.exp(jnp.minimum(y, 0.0)) - 1.0)
            o_ref[...] = y.astype(o_ref.dtype)

    out = pl.pallas_call(
        kernel,
        grid=(gm, gn, gk),
        in_specs=[pl.BlockSpec((tm_, tk_), lambda i, j, k: (i, k)),
                  pl.BlockSpec((tk_, tn_), lambda i, j, k: (k, j))] + extra_specs,
        out_specs=pl.BlockSpec((tm_, tn_), lambda i, j, k: (i, j)),
        out_shape=jax.ShapeDtypeStruct((Mp, Np), out_dtype),
        scratch_shapes=[pltpu.VMEM((tm_, tn_), jnp.float32)],
        compiler_params=pltpu.CompilerParams(
            dimension_semantics=("parallel", "parallel", "arbitrary"),
            vmem_limit_bytes=_VMEM_LIMIT),
    )(a_p, w_p, *extra)
    if (Mp, Np) != (M, N):
        out = out[:M, :N]
    return out


# --------------------------------------------------------------------------------------
# Flash-style multi-head attention
# --------------------------------------------------------------------------------------

def mha_attention(q, k, v, addmask, nhead):
    """q,k,v:(B*H,S,dh) bf16; addmask:(B,1,S) additive f32, shared across heads via index_map."""
    BH, S, dh = q.shape
    tkv = S
    for cand in (512, 256, 128):
        if S % cand == 0:
            tkv = cand
            break
    nkv = S // tkv

    def kernel(q_ref, k_ref, v_ref, m_ref, o_ref, mx_sc, l_sc, acc_sc):
        kv = pl.program_id(1)

        @pl.when(kv == 0)
        def _():
            mx_sc[...] = jnp.full_like(mx_sc, -jnp.inf)
            l_sc[...] = jnp.zeros_like(l_sc)
            acc_sc[...] = jnp.zeros_like(acc_sc)

        s = lax.dot_general(q_ref[0], k_ref[0], (((1,), (1,)), ((), ())),
                            preferred_element_type=jnp.float32)
        s = s + m_ref[0]
        m_new = jnp.maximum(mx_sc[...], jnp.max(s, axis=-1, keepdims=True))
        alpha = jnp.exp(mx_sc[...] - m_new)
        p = jnp.exp(s - m_new)
        l_sc[...] = alpha * l_sc[...] + jnp.sum(p, axis=-1, keepdims=True)
        acc_sc[...] = alpha * acc_sc[...] + jnp.dot(
            p.astype(jnp.bfloat16), v_ref[0], preferred_element_type=jnp.float32)
        mx_sc[...] = m_new

        @pl.when(kv == pl.num_programs(1) - 1)
        def _():
            o_ref[0] = (acc_sc[...] / l_sc[...]).astype(o_ref.dtype)

    return pl.pallas_call(
        kernel,
        grid=(BH, nkv),
        in_specs=[pl.BlockSpec((1, S, dh), lambda i, j: (i, 0, 0)),
                  pl.BlockSpec((1, tkv, dh), lambda i, j: (i, j, 0)),
                  pl.BlockSpec((1, tkv, dh), lambda i, j: (i, j, 0)),
                  pl.BlockSpec((1, 1, tkv), lambda i, j: (i // nhead, 0, j))],
        out_specs=pl.BlockSpec((1, S, dh), lambda i, j: (i, 0, 0)),
        out_shape=jax.ShapeDtypeStruct((BH, S, dh), jnp.bfloat16),
        scratch_shapes=[pltpu.VMEM((S, 1), jnp.float32),
                        pltpu.VMEM((S, 1), jnp.float32),
                        pltpu.VMEM((S, dh), jnp.float32)],
        compiler_params=pltpu.CompilerParams(
            dimension_semantics=("parallel", "arbitrary"),
            vmem_limit_bytes=_VMEM_LIMIT),
    )(q.astype(jnp.bfloat16), k.astype(jnp.bfloat16), v.astype(jnp.bfloat16),
      addmask.astype(jnp.float32))


def encoder_layer(x_sbd, addmask, p, nhead):
    """Post-norm TransformerEncoderLayer (eval mode); residual+LayerNorm fused into epilogues."""
    S, B, D = x_sbd.shape
    H = nhead
    dh = D // H
    x2d = x_sbd.reshape(S * B, D)
    qkv = matmul_fused(x2d, p["w_in_t"], bias=p["b_in"]).reshape(S, B, 3, H, dh)

    def to_bh(t):
        return jnp.transpose(t, (1, 2, 0, 3)).reshape(B * H, S, dh)

    o = mha_attention(to_bh(qkv[:, :, 0]), to_bh(qkv[:, :, 1]), to_bh(qkv[:, :, 2]),
                      addmask, H)
    o = jnp.transpose(o.reshape(B, H, S, dh), (2, 0, 1, 3)).reshape(S * B, D)
    h = matmul_fused(o, p["w_out_t"], bias=p["b_out"],
                     residual=x2d, ln=(p["ln1_g"], p["ln1_b"]))
    ff = matmul_fused(h, p["w1_t"], bias=p["b1"], act="relu")
    h2 = matmul_fused(ff, p["w2_t"], bias=p["b2"],
                      residual=h, ln=(p["ln2_g"], p["ln2_b"]))
    return h2.reshape(S, B, D)


# --------------------------------------------------------------------------------------
# Bidirectional LSTM (both directions in one pallas_call, time streamed in chunks)
# --------------------------------------------------------------------------------------

def _lstm_chunk(T, target=128):
    if T <= target:
        return T
    for c in (target, 64, 32, 16, 8):
        if T % c == 0:
            return c
    return T


def lstm_bidir(xg, whh_t, H):
    """xg:(2,T,B,4H) pre-computed input projections (b_ih+b_hh folded), whh_t:(2,H,4H)."""
    _, T, B, G = xg.shape
    Tc = _lstm_chunk(T)
    nch = T // Tc

    def idx_map(d, c):                       # forward: chunk c ; backward: chunk nch-1-c
        return (d, c + d * (nch - 1 - 2 * c), 0, 0)

    def kernel(xg_ref, w_ref, o_ref, h_sc, c_sc):
        d = pl.program_id(0)

        @pl.when(pl.program_id(1) == 0)
        def _():
            h_sc[...] = jnp.zeros_like(h_sc)
            c_sc[...] = jnp.zeros_like(c_sc)

        w = w_ref[...]                        # (H, 4H) bf16

        def step(i, carry):
            t = i + d * (Tc - 1 - 2 * i)      # forward: i ; backward: Tc-1-i
            gates = xg_ref[t].astype(jnp.float32) + jnp.dot(
                h_sc[...].astype(jnp.bfloat16), w, preferred_element_type=jnp.float32)
            ig = jax.nn.sigmoid(gates[:, 0:H])
            fg = jax.nn.sigmoid(gates[:, H:2 * H])
            gg = jnp.tanh(gates[:, 2 * H:3 * H])
            og = jax.nn.sigmoid(gates[:, 3 * H:4 * H])
            cc = fg * c_sc[...] + ig * gg
            hh = og * jnp.tanh(cc)
            c_sc[...] = cc
            h_sc[...] = hh
            o_ref[t] = hh.astype(o_ref.dtype)
            return carry

        lax.fori_loop(0, Tc, step, 0)

    return pl.pallas_call(
        kernel,
        grid=(2, nch),
        in_specs=[pl.BlockSpec((None, Tc, B, G), idx_map),
                  pl.BlockSpec((None, H, G), lambda d, c: (d, 0, 0))],
        out_specs=pl.BlockSpec((None, Tc, B, H), idx_map),
        out_shape=jax.ShapeDtypeStruct((2, T, B, H), jnp.bfloat16),
        scratch_shapes=[pltpu.VMEM((B, H), jnp.float32),
                        pltpu.VMEM((B, H), jnp.float32)],
        compiler_params=pltpu.CompilerParams(
            dimension_semantics=("parallel", "arbitrary"),
            vmem_limit_bytes=_VMEM_LIMIT),
    )(xg.astype(jnp.bfloat16), whh_t.astype(jnp.bfloat16))


def bilstm(x_bsf, p):
    """Bidirectional LSTM (batch_first). x:(B,S,In) -> (B,S,2H)."""
    B, S, _ = x_bsf.shape
    H = p["hidden"]
    x_tb = jnp.transpose(x_bsf, (1, 0, 2)).reshape(S * B, -1)
    xg = matmul_fused(x_tb, p["w_ih_t"], bias=p["bias"])            # both directions at once
    xg = jnp.transpose(xg.reshape(S, B, 2, 4 * H), (2, 0, 1, 3))    # (2,S,B,4H)
    out = lstm_bidir(xg, p["w_hh_t"], H)                            # (2,S,B,H)
    out = jnp.concatenate([out[0], out[1]], axis=-1)                # (S,B,2H)
    return jnp.transpose(out, (1, 0, 2))


# --------------------------------------------------------------------------------------
# GNN (per-batch fused GCN layer), conv+BN+ELU, softmax head
# --------------------------------------------------------------------------------------

def gcn_layer(adj, x, w, b):
    """ReLU(adj @ (x @ w) + b) per batch element; the (S,Fout) intermediate never leaves VMEM."""
    B, S, Fin = x.shape
    Fout = w.shape[1]
    b2 = b.reshape(1, Fout).astype(jnp.float32)

    def kernel(a_ref, x_ref, w_ref, b_ref, o_ref):
        h = jnp.dot(x_ref[0], w_ref[...], preferred_element_type=jnp.float32)
        y = jnp.dot(a_ref[0], h.astype(jnp.bfloat16),
                    preferred_element_type=jnp.float32) + b_ref[...]
        o_ref[0] = jnp.maximum(y, 0.0).astype(o_ref.dtype)

    return pl.pallas_call(
        kernel,
        grid=(B,),
        in_specs=[pl.BlockSpec((1, S, S), lambda i: (i, 0, 0)),
                  pl.BlockSpec((1, S, Fin), lambda i: (i, 0, 0)),
                  pl.BlockSpec((Fin, Fout), lambda i: (0, 0)),
                  pl.BlockSpec((1, Fout), lambda i: (0, 0))],
        out_specs=pl.BlockSpec((1, S, Fout), lambda i: (i, 0, 0)),
        out_shape=jax.ShapeDtypeStruct((B, S, Fout), jnp.bfloat16),
        compiler_params=pltpu.CompilerParams(
            dimension_semantics=("parallel",), vmem_limit_bytes=_VMEM_LIMIT),
    )(adj.astype(jnp.bfloat16), x.astype(jnp.bfloat16), w.astype(jnp.bfloat16), b2)


def gnn_forward(x, adj, p):
    # TODO(synk): GNNC internals are not in the provided source; implemented as a 4-layer GCN
    # (12*d_model -> 128 -> 64 -> 32 -> 16, ReLU, dropout inactive) matching the constructor widths.
    h = x
    for layer in p["layers"]:
        h = gcn_layer(adj, h, layer["w"], layer["b"])
    return h


def conv1d_bn_elu(x, w, b, scale, shift, *, k, pad):
    """Conv1d (channel-last) + folded eval-BatchNorm + ELU; conv = k shifted MXU matmuls."""
    B, L, Cin = x.shape
    Cout = w.shape[2]
    xp = jnp.pad(x.astype(jnp.bfloat16), ((0, 0), (pad, pad), (0, 0)))
    Lp = L + 2 * pad
    b2 = b.reshape(1, Cout).astype(jnp.float32)
    sc2 = scale.reshape(1, Cout).astype(jnp.float32)
    sh2 = shift.reshape(1, Cout).astype(jnp.float32)

    def kernel(x_ref, w_ref, b_ref, sc_ref, sh_ref, o_ref):
        xv = x_ref[0]
        acc = jnp.zeros((L, Cout), jnp.float32)
        for j in range(k):                    # static unroll: shifted-matmul accumulation
            acc = acc + jnp.dot(xv[j:j + L, :], w_ref[j],
                                preferred_element_type=jnp.float32)
        y = acc + b_ref[...]
        y = y * sc_ref[...] + sh_ref[...]
        y = jnp.where(y > 0, y, jnp.exp(jnp.minimum(y, 0.0)) - 1.0)
        o_ref[0] = y.astype(o_ref.dtype)

    return pl.pallas_call(
        kernel,
        grid=(B,),
        in_specs=[pl.BlockSpec((1, Lp, Cin), lambda i: (i, 0, 0)),
                  pl.BlockSpec((k, Cin, Cout), lambda i: (0, 0, 0)),
                  pl.BlockSpec((1, Cout), lambda i: (0, 0)),
                  pl.BlockSpec((1, Cout), lambda i: (0, 0)),
                  pl.BlockSpec((1, Cout), lambda i: (0, 0))],
        out_specs=pl.BlockSpec((1, L, Cout), lambda i: (i, 0, 0)),
        out_shape=jax.ShapeDtypeStruct((B, L, Cout), jnp.bfloat16),
        compiler_params=pltpu.CompilerParams(
            dimension_semantics=("parallel",), vmem_limit_bytes=_VMEM_LIMIT),
    )(xp, w.astype(jnp.bfloat16), b2, sc2, sh2)


def softmax_last(x):
    """Row softmax in f32 (3-class head; tiny, so kept as its own kernel)."""
    N, C = x.shape

    def kernel(x_ref, o_ref):
        v = x_ref[...].astype(jnp.float32)
        v = v - jnp.max(v, axis=-1, keepdims=True)
        e = jnp.exp(v)
        o_ref[...] = e / jnp.sum(e, axis=-1, keepdims=True)

    return pl.pallas_call(
        kernel, out_shape=jax.ShapeDtypeStruct((N, C), jnp.float32)
    )(x)


# --------------------------------------------------------------------------------------
# Full forward
# --------------------------------------------------------------------------------------

def modeld_forward(params, x, adj, src_padding_mask, nhead):
    """x:(S,B,d_model), adj:(B,S,S), src_padding_mask:(B,S) bool (True = pad)."""
    S, B, D = x.shape
    addmask = jnp.where(src_padding_mask, -1e9, 0.0).astype(jnp.float32)[:, None, :]  # (B,1,S)

    h = x.astype(jnp.bfloat16)
    for lp in params["enc_layers"]:
        h = encoder_layer(h, addmask, lp, nhead)

    xb = jnp.transpose(h, (1, 0, 2))                      # x.permute(1,0,2) -> (B,S,D)
    xb = bilstm(xb, params["lstm1"])                      # (B,S,4D)
    xb = bilstm(xb, params["lstm2"])                      # (B,S,12D)
    gnn_emb = gnn_forward(xb, adj, params["gnn"])         # (B,S,16)
    xb = jnp.concatenate([xb, gnn_emb], axis=2)           # (B,S,12D+16)

    # PyTorch permutes to (B,C,L) before Conv1d; we run the convs channel-last instead.
    c1, c2 = params["conv1"], params["conv2"]
    xb = conv1d_bn_elu(xb, c1["w"], c1["b"], c1["scale"], c1["shift"], k=9, pad=4)  # (B,S,12D)
    xb = conv1d_bn_elu(xb, c2["w"], c2["b"], c2["scale"], c2["shift"], k=3, pad=1)  # (B,S,48)

    # PyTorch's x.reshape(B,-1) flattens the channel-first (B,48,L) tensor -> channel-major.
    flat = jnp.transpose(xb, (0, 2, 1)).reshape(B, -1)    # (B, 48*L)
    n_pred = len(params["predit"])
    for i, lp in enumerate(params["predit"]):
        flat = matmul_fused(flat, lp["w"], bias=lp["b"],
                            scale=lp["scale"], shift=lp["shift"], act="relu",
                            out_dtype=jnp.float32 if i == n_pred - 1 else jnp.bfloat16)

    # x.view(B, -1, 3) + softmax(dim=2)
    return softmax_last(flat.reshape(B * S, 3)).reshape(B, S, 3)


# --------------------------------------------------------------------------------------
# Deterministic eval-mode parameters (pre-transposed / pre-packed bf16 weights)
# --------------------------------------------------------------------------------------

def init_params(key, d_model, nhead, num_layer, length):
    # TODO(synk): Attention_Encoder / BiLSTM wrapper internals are not in the provided source;
    # assumed standard post-norm TransformerEncoderLayer (dim_feedforward=4*d_model, ReLU) and
    # bidirectional batch_first LSTMs, all in eval mode.
    d_ff = 4 * d_model
    dh = d_model // nhead
    eps = 1e-5
    keys = iter(jax.random.split(key, 256))

    def w(shape, s=0.1):
        return s * jax.random.normal(next(keys), shape, jnp.float32)

    def bf(a):
        return a.astype(jnp.bfloat16)

    def zeros(n):
        return jnp.zeros((n,), jnp.float32)

    def bn_fold(n):  # running_mean=0, running_var=1, gamma=1, beta=0
        return jnp.full((n,), 1.0 / math.sqrt(1.0 + eps), jnp.float32), zeros(n)

    params = {}
    enc = []
    qscale = 1.0 / math.sqrt(dh)
    for _ in range(num_layer):
        w_in_t = jnp.transpose(w((3 * d_model, d_model)))           # (D, 3D)
        w_in_t = w_in_t.at[:, :d_model].multiply(qscale)            # fold 1/sqrt(dh) into q proj
        enc.append(dict(
            w_in_t=bf(w_in_t), b_in=zeros(3 * d_model),
            w_out_t=bf(jnp.transpose(w((d_model, d_model)))), b_out=zeros(d_model),
            ln1_g=jnp.ones((d_model,), jnp.float32), ln1_b=zeros(d_model),
            w1_t=bf(jnp.transpose(w((d_ff, d_model)))), b1=zeros(d_ff),
            w2_t=bf(jnp.transpose(w((d_model, d_ff)))), b2=zeros(d_model),
            ln2_g=jnp.ones((d_model,), jnp.float32), ln2_b=zeros(d_model),
        ))
    params["enc_layers"] = enc

    def lstm_p(inp, hid):
        w_ih = jnp.concatenate([jnp.transpose(w((4 * hid, inp))),
                                jnp.transpose(w((4 * hid, inp)))], axis=1)   # (inp, 8H) [fwd|bwd]
        w_hh = jnp.stack([jnp.transpose(w((4 * hid, hid))),
                          jnp.transpose(w((4 * hid, hid)))], axis=0)         # (2, H, 4H)
        return dict(hidden=hid, w_ih_t=bf(w_ih), bias=zeros(8 * hid),        # b_ih + b_hh folded
                    w_hh_t=bf(w_hh))

    params["lstm1"] = lstm_p(d_model, 2 * d_model)        # -> (B,S,4*d_model)
    params["lstm2"] = lstm_p(4 * d_model, 6 * d_model)    # -> (B,S,12*d_model)

    gdims = [12 * d_model, 128, 64, 32, 16]
    params["gnn"] = dict(layers=[dict(w=bf(w((gdims[i], gdims[i + 1]))), b=zeros(gdims[i + 1]))
                                 for i in range(len(gdims) - 1)])

    cin1, cout1 = 12 * d_model + 16, 12 * d_model
    s1, sh1 = bn_fold(cout1)
    params["conv1"] = dict(w=bf(jnp.transpose(w((cout1, cin1, 9), 0.05), (2, 1, 0))),
                           b=zeros(cout1), scale=s1, shift=sh1)
    s2, sh2 = bn_fold(48)
    params["conv2"] = dict(w=bf(jnp.transpose(w((48, cout1, 3), 0.05), (2, 1, 0))),
                           b=zeros(48), scale=s2, shift=sh2)

    L = length
    pdims = [48 * L, 32 * L, 16 * L, 8 * L, 3 * L]
    predit = []
    for i in range(4):
        s, sh = bn_fold(pdims[i + 1])
        predit.append(dict(w=bf(jnp.transpose(w((pdims[i + 1], pdims[i]), 0.05))),
                           b=zeros(pdims[i + 1]), scale=s, shift=sh))
    params["predit"] = predit

    # Note: ResLayer_1d (layer_number blocks) is built in the PyTorch __init__ but never used
    # in forward(), so no parameters are created for it.
    return params


# --------------------------------------------------------------------------------------
# main
# --------------------------------------------------------------------------------------

if __name__ == "__main__":
    d_model, nhead, num_layer = 8, 2, 1
    layer_number, droprate = 1, 0.3          # unused in eval forward (ResLayer_1d never called; dropout off)
    batch_size, seq = 2, 16                  # seq == `length` (Predit_layer fixes the length)

    key = jax.random.PRNGKey(0)
    kp, kx, ka = jax.random.split(key, 3)
    params = init_params(kp, d_model, nhead, num_layer, seq)

    x = jax.random.normal(kx, (seq, batch_size, d_model), jnp.float32)
    adj_raw = jax.random.uniform(ka, (batch_size, seq, seq), jnp.float32)
    adj = ((adj_raw + jnp.transpose(adj_raw, (0, 2, 1))) > 1.2).astype(jnp.float32)
    adj = adj + jnp.eye(seq, dtype=jnp.float32)[None]
    deg = jnp.clip(jnp.sum(adj, axis=-1, keepdims=True), 1.0, None)
    adj = adj / deg                                        # row-normalized adjacency
    src_padding_mask = jnp.zeros((batch_size, seq), dtype=bool)

    out = modeld_forward(params, x, adj, src_padding_mask, nhead)
    out = jax.block_until_ready(out)

    assert out.shape == (batch_size, seq, 3), out.shape
    assert bool(jnp.all(jnp.isfinite(out)))
    assert bool(jnp.allclose(jnp.sum(out, axis=-1), 1.0, atol=1e-3))
    print("KERNEL_OK")
</pallas_src>

<mosaic_0001>
module attributes {stable_mosaic.version = 11 : i64} {
  func.func @kernel(%arg0: i32, %arg1: i32, %arg2: i32, %arg3: memref<32x8xbf16, #tpu.memory_space<vmem>>, %arg4: memref<8x24xbf16, #tpu.memory_space<vmem>>, %arg5: memref<1x24xf32, #tpu.memory_space<vmem>>, %arg6: memref<32x24xbf16, #tpu.memory_space<vmem>>, %arg7: memref<32x24xf32, #tpu.memory_space<vmem>>) attributes {dimension_semantics = [#tpu.dimension_semantics<parallel>, #tpu.dimension_semantics<parallel>, #tpu.dimension_semantics<arbitrary>], iteration_bounds = array<i64: 1, 1, 1>, scalar_prefetch = 0 : i64, scratch_operands = 1 : i64, tpu.core_type = #tpu.core_type<tc>, window_params = [{transform_indices = @transform_0, window_bounds = array<i64: 32, 8>}, {transform_indices = @transform_1, window_bounds = array<i64: 8, 24>}, {transform_indices = @transform_2, window_bounds = array<i64: 1, 24>}, {transform_indices = @transform_3, window_bounds = array<i64: 32, 24>}]} {
    %c0_i32 = arith.constant 0 : i32
    %0 = arith.cmpi eq, %arg2, %c0_i32 : i32
    %1 = arith.extui %0 : i1 to i32
    %c0_i32_0 = arith.constant 0 : i32
    %2 = arith.cmpi ne, %1, %c0_i32_0 : i32
    scf.if %2 {
      %cst_10 = arith.constant 0.000000e+00 : f32
      %12 = vector.broadcast %cst_10 : f32 to vector<32x24xf32>
      %c0_11 = arith.constant 0 : index
      %c0_12 = arith.constant 0 : index
      %13 = vector.load %arg7[%c0_11, %c0_12] : memref<32x24xf32, #tpu.memory_space<vmem>>, vector<32x24xf32>
      tpu.vector_store %arg7[%c0_11, %c0_12], %12 {strides = array<i32>} : memref<32x24xf32, #tpu.memory_space<vmem>>, vector<32x24xf32>,
    } else {
    }
    %c0 = arith.constant 0 : index
    %c0_1 = arith.constant 0 : index
    %3 = vector.load %arg7[%c0, %c0_1] : memref<32x24xf32, #tpu.memory_space<vmem>>, vector<32x24xf32>
    %c0_2 = arith.constant 0 : index
    %c0_3 = arith.constant 0 : index
    %4 = vector.load %arg3[%c0_2, %c0_3] : memref<32x8xbf16, #tpu.memory_space<vmem>>, vector<32x8xbf16>
    %c0_4 = arith.constant 0 : index
    %c0_5 = arith.constant 0 : index
    %5 = vector.load %arg4[%c0_4, %c0_5] : memref<8x24xbf16, #tpu.memory_space<vmem>>, vector<8x24xbf16>
    %cst = arith.constant dense<0.000000e+00> : vector<32x24xf32>
    %6 = tpu.matmul %4, %5, %cst {dimension_numbers = #tpu.dot_dimension_numbers<[1], [0], [0], [1], [0, 0, 1, 1], [], []>} : vector<32x8xbf16>, vector<8x24xbf16>, vector<32x24xf32> -> vector<32x24xf32>
    %7 = arith.addf %3, %6 : vector<32x24xf32>
    %c0_6 = arith.constant 0 : index
    %c0_7 = arith.constant 0 : index
    %8 = vector.load %arg7[%c0_6, %c0_7] : memref<32x24xf32, #tpu.memory_space<vmem>>, vector<32x24xf32>
    tpu.vector_store %arg7[%c0_6, %c0_7], %7 {strides = array<i32>} : memref<32x24xf32, #tpu.memory_space<vmem>>, vector<32x24xf32>,
    %c0_i32_8 = arith.constant 0 : i32
    %9 = arith.cmpi eq, %arg2, %c0_i32_8 : i32
    %10 = arith.extui %9 : i1 to i32
    %c0_i32_9 = arith.constant 0 : i32
    %11 = arith.cmpi ne, %10, %c0_i32_9 : i32
    scf.if %11 {
      %c0_10 = arith.constant 0 : index
      %c0_11 = arith.constant 0 : index
      %12 = vector.load %arg7[%c0_10, %c0_11] : memref<32x24xf32, #tpu.memory_space<vmem>>, vector<32x24xf32>
      %c0_12 = arith.constant 0 : index
      %c0_13 = arith.constant 0 : index
      %13 = vector.load %arg5[%c0_12, %c0_13] : memref<1x24xf32, #tpu.memory_space<vmem>>, vector<1x24xf32>
      %14 = vector.broadcast %13 : vector<1x24xf32> to vector<32x24xf32>
      %15 = arith.addf %12, %14 : vector<32x24xf32>
      %16 = arith.truncf %15 : vector<32x24xf32> to vector<32x24xbf16>
      %c0_14 = arith.constant 0 : index
      %c0_15 = arith.constant 0 : index
      %17 = vector.load %arg6[%c0_14, %c0_15] : memref<32x24xbf16, #tpu.memory_space<vmem>>, vector<32x24xbf16>
      tpu.vector_store %arg6[%c0_14, %c0_15], %16 {strides = array<i32>} : memref<32x24xbf16, #tpu.memory_space<vmem>>, vector<32x24xbf16>,
    } else {
    }
    return
  }
  func.func @transform_0(%arg0: i32, %arg1: i32, %arg2: i32) -> (i32, i32) {
    %c0_i32 = arith.constant 0 : i32
    return %arg0, %arg2 : i32, i32
  }
  func.func @transform_1(%arg0: i32, %arg1: i32, %arg2: i32) -> (i32, i32) {
    %c0_i32 = arith.constant 0 : i32
    return %arg2, %arg1 : i32, i32
  }
  func.func @transform_2(%arg0: i32, %arg1: i32, %arg2: i32) -> (i32, i32) {
    %c0_i32 = arith.constant 0 : i32
    %c0_i32_0 = arith.constant 0 : i32
    return %c0_i32, %arg1 : i32, i32
  }
  func.func @transform_3(%arg0: i32, %arg1: i32, %arg2: i32) -> (i32, i32) {
    %c0_i32 = arith.constant 0 : i32
    return %arg0, %arg1 : i32, i32
  }
}

</mosaic_0001>

<llo_original>
// kernel: tpu_custom_call.1
$region0: #{tpu_custom_call.1}
  #allocation0 [shape = 'u32[]', space=smem, size = 0x4, offset = 0x4, fixed_abs, tag = 'smem constant byte address 0x4 - core index']
  #allocation1 [shape = 'u32[144,128]{1,0:T(1,128)}', space=vmem, size = 0x12000, scoped, tag = 'internal scratch']
  #allocation2 [shape = 'f32[32,24]{1,0:T(8,128)}', space=vmem, size = 0x4000, scoped, tag = 'scratch operand']
  %s0 = inlined_call_operand.vmem [shape: bf16[32,8], index: 0, kind: input, shape index: {}]
  %s1 = inlined_call_operand.vmem [shape: bf16[8,24], index: 1, kind: input, shape index: {}]
  %s2 = inlined_call_operand.vmem [shape: f32[1,24], index: 2, kind: input, shape index: {}]
  %s3 = inlined_call_operand.vmem [shape: bf16[32,24], index: 3, kind: output, shape index: {}]
  %s4 = sld [smem:[#allocation0]]
  $region30: #{tpu_custom_call.1} parent=0
    _
  %s6 = ssub.s32 1, %s4
  %s7 = scalar_select 0, %s6, %s4
  // Predicated region
  $region2: #{tpu_custom_call.1} parent=0 // pred_check
    _
  $region3: #{tpu_custom_call.1} parent=0 // pred_check_branch
    %9 = sbr.rel (0) target = $region5
  $region4: #{tpu_custom_call.1} parent=0 // pred_region
    _
  $region5: #{tpu_custom_call.1} parent=0 // pred_fallthru
    _
  // Predicated region
  $region6: #{tpu_custom_call.1} parent=0 // pred_check
    _
  $region7: #{tpu_custom_call.1} parent=0 // pred_check_branch
    %11 = sbr.rel (0) target = $region9
  $region8: #{tpu_custom_call.1} parent=0 // pred_region
    _
  $region9: #{tpu_custom_call.1} parent=0 // pred_fallthru
    _
  // Predicated region
  $region10: #{tpu_custom_call.1} parent=0 // pred_check
    _
  $region11: #{tpu_custom_call.1} parent=0 // pred_check_branch
    %13 = sbr.rel (0) target = $region13
  $region12: #{tpu_custom_call.1} parent=0 // pred_region
    _
  $region13: #{tpu_custom_call.1} parent=0 // pred_fallthru
    _
  %p15 = scmp.eq.s32.totalorder 0, 0
  // Predicated region
  $region14: #{tpu_custom_call.1} parent=0 // pred_check
    %p16 = pneg %p15
  $region15: #{tpu_custom_call.1} parent=0 // pred_check_branch
    %18 = sbr.rel (%p16) target = $region17
  $region16: #{tpu_custom_call.1} parent=0 // pred_region
    %vm19 = vcmask 195584
    %20 = vst.msk [vmem:[#allocation2] sm:$0xff] %vm19, 0.0
    %21 = vst.msk [vmem:[#allocation2 + $0x8] sm:$0xff] %vm19, 0.0
    %22 = vst.msk [vmem:[#allocation2 + $0x10] sm:$0xff] %vm19, 0.0
    %23 = vst.msk [vmem:[#allocation2 + $0x18] sm:$0xff] %vm19, 0.0
  $region17: #{tpu_custom_call.1} parent=0 // pred_fallthru
    _
  %v24 = vld [vmem:[#allocation2] sm:$0xff]
  %v25 = vld [vmem:[#allocation2 + $0x8] sm:$0xff]
  %v26 = vld [vmem:[#allocation2 + $0x10] sm:$0xff]
  %v27 = vld [vmem:[#allocation2 + $0x18] sm:$0xff]
  %v28 = vld [vmem:[%s0] sm:$0xf]
  %v29 = vld [vmem:[%s0 + $0x4] sm:$0xf]
  %v30 = vld [vmem:[%s0 + $0x8] sm:$0xf]
  %v31 = vld [vmem:[%s0 + $0xc] sm:$0xf]
  %v32 = vld [vmem:[%s1] sm:$0xf]
  %v37 = vunpack.c.l.b16 %v28
  %v38 = vunpack.c.l.b16 %v29
  %v39 = vunpack.c.l.b16 %v30
  %v40 = vunpack.c.l.b16 %v31
  %v41 = vpack.c.b16 %v38, %v37
  %v42 = vpack.c.b16 %v40, %v39
  %vm43 = vcmask 64512
  %v45 = vsel %vm43, %v41, 0
  %v48 = vsel %vm43, %v42, 0
  %vm50 = vcmask 1043456
  %v52 = vsel %vm50, %v32, 0
  %54 = vmatprep.subr.bf16.mxu0 0
  %55 = vmatpush1.bf16.msra.mxu0 %v52
  %56 = vmatprep.subr.bf16.mxu0 0
  %57 = vmatpush1.bf16.msra.mxu0 0
  %58 = vmatprep.subr.bf16.mxu0 0
  %59 = vmatpush1.bf16.msra.mxu0 0
  %60 = vmatprep.subr.bf16.mxu0 0
  %61 = vmatpush1.bf16.msra.mxu0 0
  %62 = vmatprep.subr.bf16.mxu0 0
  %63 = vmatpush1.bf16.msra.mxu0 0
  %64 = vmatprep.subr.bf16.mxu0 0
  %65 = vmatpush1.bf16.msra.mxu0 0
  %66 = vmatprep.subr.bf16.mxu0 0
  %67 = vmatpush1.bf16.msra.mxu0 0
  %68 = vmatprep.subr.bf16.mxu0 0
  %69 = vmatpush1.bf16.msra.mxu0 0
  %70 = vmatprep.subr.bf16.mxu0 0
  %71 = vmatpush1.bf16.msra.mxu0 0
  %72 = vmatprep.subr.bf16.mxu0 0
  %73 = vmatpush1.bf16.msra.mxu0 0
  %74 = vmatprep.subr.bf16.mxu0 0
  %75 = vmatpush1.bf16.msra.mxu0 0
  %76 = vmatprep.subr.bf16.mxu0 0
  %77 = vmatpush1.bf16.msra.mxu0 0
  %78 = vmatprep.subr.bf16.mxu0 0
  %79 = vmatpush1.bf16.msra.mxu0 0
  %80 = vmatprep.subr.bf16.mxu0 0
  %81 = vmatpush1.bf16.msra.mxu0 0
  %82 = vmatprep.subr.bf16.mxu0 0
  %83 = vmatpush1.bf16.msra.mxu0 0
  %84 = vmatprep.subr.bf16.mxu0 0
  %85 = vmatpush1.bf16.msra.mxu0 0
  %86 = vmatprep.mubr.bf16.mxu0 0
  %87 = vmatmul.mubr.bf16.gmra.mrb[0].mxu0 %v45
  %v88 = vpop.f32.mrb[0].mxu0
  %v89 = vadd.f32 0.0, %v88
  %v90 = vpop.f32.mrb[0].mxu0
  %v91 = vpop.f32.mrb[0].mxu0
  %v92 = vadd.f32 0.0, %v91
  %v93 = vpop.f32.mrb[0].mxu0
  %94 = vmatprep.mubr.bf16.mxu0 0
  %95 = vmatmul.mubr.bf16.gmra.mrb[0].mxu0 %v48
  %v96 = vpop.f32.mrb[0].mxu0
  %v97 = vadd.f32 0.0, %v96
  %v98 = vpop.f32.mrb[0].mxu0
  %v99 = vpop.f32.mrb[0].mxu0
  %v100 = vadd.f32 0.0, %v99
  %v101 = vpop.f32.mrb[0].mxu0
  %102 = vdwg.mxu0
  %v103 = vadd.f32 %v24, %v89
  %v104 = vadd.f32 %v25, %v92
  %v105 = vadd.f32 %v26, %v97
  %v106 = vadd.f32 %v27, %v100
  %vm107 = vcmask 195584
  %108 = vst.msk [vmem:[#allocation2] sm:$0xff] %vm107, %v103
  %109 = vst.msk [vmem:[#allocation2 + $0x8] sm:$0xff] %vm107, %v104
  %110 = vst.msk [vmem:[#allocation2 + $0x10] sm:$0xff] %vm107, %v105
  %111 = vst.msk [vmem:[#allocation2 + $0x18] sm:$0xff] %vm107, %v106
  // Predicated region
  $region18: #{tpu_custom_call.1} parent=0 // pred_check
    %p112 = pneg %p15
  $region19: #{tpu_custom_call.1} parent=0 // pred_check_branch
    %114 = sbr.rel (%p112) target = $region21
  $region20: #{tpu_custom_call.1} parent=0 // pred_region
    %v115 = vld [vmem:[#allocation2] sm:$0xff]
    %v116 = vld [vmem:[#allocation2 + $0x8] sm:$0xff]
    %v117 = vld [vmem:[#allocation2 + $0x10] sm:$0xff]
    %v118 = vld [vmem:[#allocation2 + $0x18] sm:$0xff]
    %v119 = vld [vmem:[%s2] sm:$0x1]
    %v121 = vlaneseq
    %v122 = vshrl.u32 %v121, 7
    %v123 = vsub.s32 0, %v122
    %v124 = vrot.slane %v119, %v123
    %v126 = vadd.f32 %v115, %v124
    %v127 = vadd.f32 %v116, %v124
    %v128 = vadd.f32 %v117, %v124
    %v129 = vadd.f32 %v118, %v124
    %v130 = vpack.c.bf16 %v127, %v126
    %v131 = vpack.c.bf16 %v129, %v128
    %v134 = vunpack.c.l.b16 %v130
    %v135 = vunpack.c.h.b16 %v130
    %v136 = vunpack.c.l.b16 %v131
    %v137 = vunpack.c.h.b16 %v131
    %v138 = vpack.c.b16 %v134, %v134
    %v139 = vpack.c.b16 %v135, %v135
    %v140 = vpack.c.b16 %v136, %v136
    %v141 = vpack.c.b16 %v137, %v137
    %vm146 = vcmask 191488
    %147 = vst.msk [vmem:[%s3] sm:$0xf] %vm146, %v138
    %148 = vst.msk [vmem:[%s3 + $0x4] sm:$0xf] %vm146, %v139
    %149 = vst.msk [vmem:[%s3 + $0x8] sm:$0xf] %vm146, %v140
    %150 = vst.msk [vmem:[%s3 + $0xc] sm:$0xf] %vm146, %v141
  $region21: #{tpu_custom_call.1} parent=0 // pred_fallthru
    _
  // Predicated region
  $region22: #{tpu_custom_call.1} parent=0 // pred_check
    _
  $region23: #{tpu_custom_call.1} parent=0 // pred_check_branch
    %152 = sbr.rel (0) target = $region25
  $region24: #{tpu_custom_call.1} parent=0 // pred_region
    _
  $region25: #{tpu_custom_call.1} parent=0 // pred_fallthru
    _
  // Predicated region
  $region26: #{tpu_custom_call.1} parent=0 // pred_check
    _
  $region27: #{tpu_custom_call.1} parent=0 // pred_check_branch
    %154 = sbr.rel (0) target = $region29
  $region28: #{tpu_custom_call.1} parent=0 // pred_region
    _
  $region29: #{tpu_custom_call.1} parent=0 // pred_fallthru
    _

</llo_original>
